<compile_context>
chip_gen: v7x
topology: tpu7x:2x2x1
jax: 0.10.0
libtpu: 0.0.40
codegen_flags: <defaults>
</compile_context>

<pallas_src>
import functools

import jax
import jax.numpy as jnp
from jax.experimental import pallas as pl
from jax.experimental.pallas import tpu as pltpu


# ---------------------------------------------------------------------------
# helpers
# ---------------------------------------------------------------------------
def _round_up(x, m):
    return ((x + m - 1) // m) * m


def _vmem_limits():
    """(scoped_limit_bytes, tile_budget_bytes), generation-aware."""
    try:
        phys = int(pltpu.get_tpu_info().vmem_capacity_bytes)
    except Exception:
        phys = 64 * 1024 * 1024  # conservative default = v7x per-TC VMEM
    scoped_limit = int(phys * 0.75)   # raised scoped limit, with headroom
    tile_budget = int(phys * 0.40)    # what the double-buffered tiles may use
    return scoped_limit, tile_budget


def _largest_tile(dim_pad, cap):
    """Largest multiple of 128 that divides dim_pad and is <= cap (>= 128)."""
    best = 128
    t = 128
    while t <= min(dim_pad, cap):
        if dim_pad % t == 0:
            best = t
        t += 128
    return best


def _pick_tiles(m, k_pad, n_pad, out_itemsize, tile_budget):
    # K: collapse the reduction into a single tile when modest; otherwise a
    # K loop over multiple-of-128 tiles (~1024 wide).
    if k_pad <= 2048:
        tk = k_pad
    else:
        tk = _largest_tile(k_pad, 1024)

    # N: maximize tn (each A tile is re-DMA'd and re-tanh'ed n_pad/tn times).
    tn = _largest_tile(n_pad, 2048)
    # M: big enough to amortize per-step overhead, multiple of 8 (f32 x tiles).
    tm = min(_round_up(m, 8), 512)

    def usage(tm_, tk_, tn_):
        a = 2 * tm_ * tk_ * 4                 # f32 A tiles, double-buffered
        w = 2 * tk_ * tn_ * 2                 # bf16 W tiles, double-buffered
        o = 2 * tm_ * tn_ * out_itemsize      # output tiles, double-buffered
        b = 2 * tn_ * 4                       # bias tile
        acc = tm_ * tn_ * 4 if tk_ < k_pad else 0
        return a + w + o + b + acc

    # Shrink until the double-buffered working set fits the VMEM budget.
    while usage(tm, tk, tn) > tile_budget:
        if tn > 512:
            tn = _largest_tile(n_pad, tn // 2)
        elif tm > 128:
            tm = max(128, _round_up(tm // 2, 8))
        elif tk > 512:
            tk = _largest_tile(k_pad, tk // 2)
        else:
            break

    m_pad = _round_up(m, tm)

    # v7x megacore: if the whole problem is one (i, j) tile, split N so a
    # "parallel" grid axis has extent >= 2 (keeps the second TensorCore busy).
    if (m_pad // tm) * (n_pad // tn) == 1 and tn % 256 == 0:
        tn //= 2

    return tm, tk, tn, m_pad


# ---------------------------------------------------------------------------
# kernels
# ---------------------------------------------------------------------------
def _fc_kernel_single_k(x_ref, w_ref, b_ref, o_ref, *, use_activation):
    # dropout_rate=0.0 (eval) -> identity.
    h = x_ref[...].astype(jnp.float32)
    if use_activation:
        h = jnp.tanh(h)                       # EUP, f32 (v5e has no bf16 EUP)
    acc = jnp.dot(h.astype(jnp.bfloat16), w_ref[...],
                  preferred_element_type=jnp.float32)
    o_ref[...] = (acc + b_ref[...]).astype(o_ref.dtype)


def _fc_kernel_kloop(x_ref, w_ref, b_ref, o_ref, acc_ref, *, use_activation):
    k = pl.program_id(2)

    @pl.when(k == 0)
    def _():
        acc_ref[...] = jnp.zeros_like(acc_ref)

    h = x_ref[...].astype(jnp.float32)
    if use_activation:
        h = jnp.tanh(h)
    acc_ref[...] += jnp.dot(h.astype(jnp.bfloat16), w_ref[...],
                            preferred_element_type=jnp.float32)

    @pl.when(k == pl.num_programs(2) - 1)
    def _():
        # Bias added exactly once, single store per (i, j) output tile.
        o_ref[...] = (acc_ref[...] + b_ref[...]).astype(o_ref.dtype)


# ---------------------------------------------------------------------------
# parameter prep (init-time, NOT in the per-call hot path)
# ---------------------------------------------------------------------------
def init_fc_params(key, input_dim, output_dim, dtype=jnp.float32):
    """nn.Linear-style init (uniform(-1/sqrt(in), 1/sqrt(in)))."""
    kw, kb = jax.random.split(key)
    bound = 1.0 / (input_dim ** 0.5)
    weight = jax.random.uniform(kw, (output_dim, input_dim), dtype, -bound, bound)
    bias = jax.random.uniform(kb, (output_dim,), dtype, -bound, bound)
    return weight, bias


def prepare_fc_params(weight_out_in, bias):
    """One-time prep: transpose to [K, N], pad K/N to multiples of 128, cast
    the weight to bf16 for the MXU, bias to f32. Done once at init, never per
    forward call."""
    out_dim, in_dim = weight_out_in.shape
    k_pad = _round_up(in_dim, 128)
    n_pad = _round_up(out_dim, 128)
    w_kn = jnp.transpose(weight_out_in).astype(jnp.bfloat16)
    if (k_pad, n_pad) != (in_dim, out_dim):
        w_kn = jnp.pad(w_kn, ((0, k_pad - in_dim), (0, n_pad - out_dim)))
    b = bias.astype(jnp.float32)
    if n_pad != out_dim:
        b = jnp.pad(b, (0, n_pad - out_dim))
    return w_kn, b.reshape(1, n_pad), out_dim


# ---------------------------------------------------------------------------
# forward
# ---------------------------------------------------------------------------
def fc_layer(x, weight_kn_pad, bias_pad, out_dim, use_activation=True):
    """FCLayer forward.

    x:             (..., input_dim), f32 (or bf16) activations
    weight_kn_pad: (k_pad, n_pad) bf16, from prepare_fc_params
    bias_pad:      (1, n_pad) f32, from prepare_fc_params
    out_dim:       logical output_dim (<= n_pad)
    """
    # TODO(synk): training-mode dropout (dropout_rate > 0) would need
    # pltpu.prng_seed / prng_random_bits; p=0.0 (eval) is an identity here.
    in_dim = x.shape[-1]
    k_pad, n_pad = weight_kn_pad.shape
    lead = x.shape[:-1]
    m = 1
    for d in lead:
        m *= d

    out_itemsize = jnp.dtype(x.dtype).itemsize
    scoped_limit, tile_budget = _vmem_limits()
    tm, tk, tn, m_pad = _pick_tiles(m, k_pad, n_pad, out_itemsize, tile_budget)

    # Zero-padding is exact: tanh(0) == 0 contributes nothing along K; padded
    # M rows / N cols are sliced off below. Only x (which changes per call)
    # is padded here; it is skipped entirely when already aligned.
    x2 = x.reshape(m, in_dim)
    if (m_pad, k_pad) != (m, in_dim):
        x2 = jnp.pad(x2, ((0, m_pad - m), (0, k_pad - in_dim)))

    grid_m = m_pad // tm
    grid_n = n_pad // tn
    grid_k = k_pad // tk

    # CostEstimate accounting for the tiling revisit factors and per-j tanh.
    cost = pl.CostEstimate(
        flops=2 * m_pad * n_pad * k_pad,
        transcendentals=(m_pad * k_pad * grid_n) if use_activation else 0,
        bytes_accessed=(m_pad * k_pad * 4 * grid_n      # A re-read per j
                        + k_pad * n_pad * 2 * grid_m    # bf16 W re-read per i
                        + n_pad * 4 * grid_m            # bias
                        + m_pad * n_pad * out_itemsize),
    )

    if grid_k == 1:
        # Single-K fast path: no accumulator scratch, no pl.when branches.
        kernel = functools.partial(_fc_kernel_single_k,
                                   use_activation=use_activation)
        grid = (grid_m, grid_n)
        in_specs = [
            pl.BlockSpec((tm, tk), lambda i, j: (i, 0)),   # A tile (f32)
            pl.BlockSpec((tk, tn), lambda i, j: (0, j)),   # W tile (bf16)
            pl.BlockSpec((1, tn), lambda i, j: (0, j)),    # bias tile (f32)
        ]
        out_specs = pl.BlockSpec((tm, tn), lambda i, j: (i, j))
        scratch_shapes = []
        dim_sem = ("parallel", "parallel")
    else:
        kernel = functools.partial(_fc_kernel_kloop,
                                   use_activation=use_activation)
        grid = (grid_m, grid_n, grid_k)
        in_specs = [
            pl.BlockSpec((tm, tk), lambda i, j, k: (i, k)),
            pl.BlockSpec((tk, tn), lambda i, j, k: (k, j)),
            pl.BlockSpec((1, tn), lambda i, j, k: (0, j)),
        ]
        out_specs = pl.BlockSpec((tm, tn), lambda i, j, k: (i, j))
        scratch_shapes = [pltpu.VMEM((tm, tn), jnp.float32)]
        dim_sem = ("parallel", "parallel", "arbitrary")

    out = pl.pallas_call(
        kernel,
        out_shape=jax.ShapeDtypeStruct((m_pad, n_pad), x.dtype),
        grid_spec=pltpu.PrefetchScalarGridSpec(
            num_scalar_prefetch=0,
            grid=grid,
            in_specs=in_specs,
            out_specs=out_specs,
            scratch_shapes=scratch_shapes,
        ),
        compiler_params=pltpu.CompilerParams(
            dimension_semantics=dim_sem,
            vmem_limit_bytes=scoped_limit,
        ),
        cost_estimate=cost,
    )(x2, weight_kn_pad, bias_pad)

    out = out[:m, :out_dim]
    return out.reshape(*lead, out_dim)


# ---------------------------------------------------------------------------
# demo / correctness check
# ---------------------------------------------------------------------------
if __name__ == "__main__":
    key = jax.random.PRNGKey(0)
    kx, kp = jax.random.split(key)

    batch, seq, input_dim, output_dim = 2, 8, 32, 32
    x = jax.random.normal(kx, (batch, seq, input_dim), dtype=jnp.float32)

    weight, bias = init_fc_params(kp, input_dim, output_dim)      # torch layout
    w_kn_pad, b_pad, out_dim = prepare_fc_params(weight, bias)    # once, at init

    y = fc_layer(x, w_kn_pad, b_pad, out_dim, use_activation=True)
    y = jax.block_until_ready(y)

    # Reference (plain JAX), matching the kernel's bf16 MXU operands.
    h_ref = jnp.tanh(x).astype(jnp.bfloat16).astype(jnp.float32)
    w_ref = jnp.transpose(weight).astype(jnp.bfloat16).astype(jnp.float32)
    ref = (h_ref.reshape(-1, input_dim) @ w_ref + bias).reshape(
        batch, seq, output_dim)

    assert y.shape == (batch, seq, output_dim)
    assert jnp.allclose(y, ref, atol=5e-3, rtol=5e-3), float(
        jnp.max(jnp.abs(y - ref)))

    print("KERNEL_OK")
</pallas_src>

<mosaic_0001>
module attributes {stable_mosaic.version = 11 : i64} {
  func.func @_fc_kernel_single_k(%arg0: i32, %arg1: i32, %arg2: memref<16x128xf32, #tpu.memory_space<vmem>>, %arg3: memref<128x128xbf16, #tpu.memory_space<vmem>>, %arg4: memref<1x128xf32, #tpu.memory_space<vmem>>, %arg5: memref<16x128xf32, #tpu.memory_space<vmem>>) attributes {dimension_semantics = [#tpu.dimension_semantics<parallel>, #tpu.dimension_semantics<parallel>], iteration_bounds = array<i64: 1, 1>, scalar_prefetch = 0 : i64, scratch_operands = 0 : i64, tpu.core_type = #tpu.core_type<tc>, window_params = [{transform_indices = @transform_0, window_bounds = array<i64: 16, 128>}, {transform_indices = @transform_1, window_bounds = array<i64: 128, 128>}, {transform_indices = @transform_2, window_bounds = array<i64: 1, 128>}, {transform_indices = @transform_3, window_bounds = array<i64: 16, 128>}]} {
    %c0 = arith.constant 0 : index
    %c0_0 = arith.constant 0 : index
    %0 = vector.load %arg2[%c0, %c0_0] : memref<16x128xf32, #tpu.memory_space<vmem>>, vector<16x128xf32>
    %1 = math.tanh %0 : vector<16x128xf32>
    %2 = arith.truncf %1 : vector<16x128xf32> to vector<16x128xbf16>
    %c0_1 = arith.constant 0 : index
    %c0_2 = arith.constant 0 : index
    %3 = vector.load %arg3[%c0_1, %c0_2] : memref<128x128xbf16, #tpu.memory_space<vmem>>, vector<128x128xbf16>
    %cst = arith.constant dense<0.000000e+00> : vector<16x128xf32>
    %4 = tpu.matmul %2, %3, %cst {dimension_numbers = #tpu.dot_dimension_numbers<[1], [0], [0], [1], [0, 0, 1, 1], [], []>} : vector<16x128xbf16>, vector<128x128xbf16>, vector<16x128xf32> -> vector<16x128xf32>
    %c0_3 = arith.constant 0 : index
    %c0_4 = arith.constant 0 : index
    %5 = vector.load %arg4[%c0_3, %c0_4] : memref<1x128xf32, #tpu.memory_space<vmem>>, vector<1x128xf32>
    %6 = vector.broadcast %5 : vector<1x128xf32> to vector<16x128xf32>
    %7 = arith.addf %4, %6 : vector<16x128xf32>
    %c0_5 = arith.constant 0 : index
    %c0_6 = arith.constant 0 : index
    %8 = vector.load %arg5[%c0_5, %c0_6] : memref<16x128xf32, #tpu.memory_space<vmem>>, vector<16x128xf32>
    tpu.vector_store %arg5[%c0_5, %c0_6], %7 {strides = array<i32>} : memref<16x128xf32, #tpu.memory_space<vmem>>, vector<16x128xf32>,
    return
  }
  func.func @transform_0(%arg0: i32, %arg1: i32) -> (i32, i32) {
    %c0_i32 = arith.constant 0 : i32
    %c0_i32_0 = arith.constant 0 : i32
    return %arg0, %c0_i32 : i32, i32
  }
  func.func @transform_1(%arg0: i32, %arg1: i32) -> (i32, i32) {
    %c0_i32 = arith.constant 0 : i32
    %c0_i32_0 = arith.constant 0 : i32
    return %c0_i32, %arg1 : i32, i32
  }
  func.func @transform_2(%arg0: i32, %arg1: i32) -> (i32, i32) {
    %c0_i32 = arith.constant 0 : i32
    %c0_i32_0 = arith.constant 0 : i32
    return %c0_i32, %arg1 : i32, i32
  }
  func.func @transform_3(%arg0: i32, %arg1: i32) -> (i32, i32) {
    %c0_i32 = arith.constant 0 : i32
    return %arg0, %arg1 : i32, i32
  }
}

</mosaic_0001>

<llo_original>
// kernel: tpu_custom_call.1
$region0: #{tpu_custom_call.1}
  #allocation0 [shape = 'u32[]', space=smem, size = 0x4, offset = 0x4, fixed_abs, tag = 'smem constant byte address 0x4 - core index']
  #allocation1 [shape = 'u32[144,128]{1,0:T(1,128)}', space=vmem, size = 0x12000, scoped, tag = 'internal scratch']
  %s0 = inlined_call_operand.hbm [shape: f32[16,128], index: 0, kind: input, shape index: {}]
  %s1 = inlined_call_operand.hbm [shape: bf16[128,128], index: 1, kind: input, shape index: {}]
  %s2 = inlined_call_operand.vmem [shape: f32[1,128], index: 2, kind: input, shape index: {}]
  %s3 = inlined_call_operand.hbm [shape: f32[16,128], index: 3, kind: output, shape index: {}]
  %s4 = sld [smem:[#allocation0]]
  $region30: #{tpu_custom_call.1} parent=0
    _
  %s6 = ssub.s32 1, %s4
  %s7 = scalar_select 0, %s6, %s4
  $region1: #{tpu_custom_call.1} parent=0
    #allocation2 [shape = 'u8[8192]{0}', space=vmem, size = 0x2000, scoped, tag = 'input window, operand 0, single buffered']
    #allocation3 [shape = 's32[1]{0}', space=sflag, size = 0x4, scoped, tag = 'scoped memory for tpu_custom_call.1']
    #allocation4 [shape = 's32[1]{0}', space=sflag, size = 0x4, scoped, tag = 'scoped memory for tpu_custom_call.1']
    #allocation5 [shape = 'u8[32768]{0}', space=vmem, size = 0x8000, scoped, tag = 'input window, operand 1, single buffered']
    #allocation6 [shape = 's32[1]{0}', space=sflag, size = 0x4, scoped, tag = 'scoped memory for tpu_custom_call.1']
    #allocation7 [shape = 'u8[8192]{0}', space=vmem, size = 0x2000, scoped, tag = 'output window, operand 0, single buffered']
    %8 = vsyncpa [#allocation3], 0
    %9 = vsyncpa [#allocation6], 0
    %10 = vsyncpa [#allocation4], 0
    // Predicated region
    $region2: #{tpu_custom_call.1} parent=1 // pred_check
      _
    $region3: #{tpu_custom_call.1} parent=1 // pred_check_branch
      %12 = sbr.rel (0) target = $region5
    $region4: #{tpu_custom_call.1} parent=1 // pred_region
      %s14 = ssub.s32 256, 256
      %15 = vsyncadd [#allocation3], %s14
      %s16 = sshll.u32 [#allocation2], 4
      %s17 = int_to_ptr.vmem [resolvable:$true] %s16
      %22 = dma.hbm_to_vmem [thread:$0]  %s0, 256, %s17, [#allocation3], 128, 128, 8
    $region5: #{tpu_custom_call.1} parent=1 // pred_fallthru
      _
    // Predicated region
    $region6: #{tpu_custom_call.1} parent=1 // pred_check
      _
    $region7: #{tpu_custom_call.1} parent=1 // pred_check_branch
      %24 = sbr.rel (0) target = $region9
    $region8: #{tpu_custom_call.1} parent=1 // pred_region
      %s26 = ssub.s32 1024, 1024
      %27 = vsyncadd [#allocation6], %s26
      %s28 = sshll.u32 [#allocation5], 4
      %s29 = int_to_ptr.vmem [resolvable:$true] %s28
      %34 = dma.hbm_to_vmem [thread:$0]  %s1, 1024, %s29, [#allocation6], 64, 64, 4
    $region9: #{tpu_custom_call.1} parent=1 // pred_fallthru
      _
    // Predicated region
    $region10: #{tpu_custom_call.1} parent=1 // pred_check
      _
    $region11: #{tpu_custom_call.1} parent=1 // pred_check_branch
      %36 = sbr.rel (0) target = $region13
    $region12: #{tpu_custom_call.1} parent=1 // pred_region
      _
    $region13: #{tpu_custom_call.1} parent=1 // pred_fallthru
      _
    // Predicated region
    $region14: #{tpu_custom_call.1} parent=1 // pred_check
      _
    $region15: #{tpu_custom_call.1} parent=1 // pred_check_branch
      %38 = sbr.rel (0) target = $region17
    $region16: #{tpu_custom_call.1} parent=1 // pred_region
      %39 = dma.done [#allocation3], 256
    $region17: #{tpu_custom_call.1} parent=1 // pred_fallthru
      _
    // Predicated region
    $region18: #{tpu_custom_call.1} parent=1 // pred_check
      _
    $region19: #{tpu_custom_call.1} parent=1 // pred_check_branch
      %41 = sbr.rel (0) target = $region21
    $region20: #{tpu_custom_call.1} parent=1 // pred_region
      %42 = dma.done [#allocation6], 1024
    $region21: #{tpu_custom_call.1} parent=1 // pred_fallthru
      _
    %v44 = vld [vmem:[#allocation2] sm:$0xff]
    %v45 = vld [vmem:[#allocation2 + $0x8] sm:$0xff]
    %v46 = vtanh.pop %v44
    %v47 = vtanh.pop %v45
    %v48 = vpack.c.bf16 %v47, %v46
    %v49 = vld [vmem:[#allocation5] sm:$0xf]
    %v50 = vld [vmem:[#allocation5 + $0x4] sm:$0xf]
    %v51 = vld [vmem:[#allocation5 + $0x8] sm:$0xf]
    %v52 = vld [vmem:[#allocation5 + $0xc] sm:$0xf]
    %v53 = vld [vmem:[#allocation5 + $0x10] sm:$0xf]
    %v54 = vld [vmem:[#allocation5 + $0x14] sm:$0xf]
    %v55 = vld [vmem:[#allocation5 + $0x18] sm:$0xf]
    %v56 = vld [vmem:[#allocation5 + $0x1c] sm:$0xf]
    %v57 = vld [vmem:[#allocation5 + $0x20] sm:$0xf]
    %v58 = vld [vmem:[#allocation5 + $0x24] sm:$0xf]
    %v59 = vld [vmem:[#allocation5 + $0x28] sm:$0xf]
    %v60 = vld [vmem:[#allocation5 + $0x2c] sm:$0xf]
    %v61 = vld [vmem:[#allocation5 + $0x30] sm:$0xf]
    %v62 = vld [vmem:[#allocation5 + $0x34] sm:$0xf]
    %v63 = vld [vmem:[#allocation5 + $0x38] sm:$0xf]
    %v64 = vld [vmem:[#allocation5 + $0x3c] sm:$0xf]
    %v65 = vld [vmem:[%s2] sm:$0x1]
    %v67 = vlaneseq
    %v68 = vshrl.u32 %v67, 7
    %v69 = vsub.s32 0, %v68
    %v70 = vrot.slane %v65, %v69
    %v88 = vunpack.c.l.b16 %v49
    %v89 = vunpack.c.l.b16 %v50
    %v90 = vunpack.c.l.b16 %v51
    %v91 = vunpack.c.l.b16 %v52
    %v92 = vunpack.c.l.b16 %v53
    %v93 = vunpack.c.l.b16 %v54
    %v94 = vunpack.c.l.b16 %v55
    %v95 = vunpack.c.l.b16 %v56
    %v96 = vunpack.c.l.b16 %v57
    %v97 = vunpack.c.l.b16 %v58
    %v98 = vunpack.c.l.b16 %v59
    %v99 = vunpack.c.l.b16 %v60
    %v100 = vunpack.c.l.b16 %v61
    %v101 = vunpack.c.l.b16 %v62
    %v102 = vunpack.c.l.b16 %v63
    %v103 = vunpack.c.l.b16 %v64
    %v104 = vpack.c.b16 %v89, %v88
    %v105 = vpack.c.b16 %v91, %v90
    %v106 = vpack.c.b16 %v93, %v92
    %v107 = vpack.c.b16 %v95, %v94
    %v108 = vpack.c.b16 %v97, %v96
    %v109 = vpack.c.b16 %v99, %v98
    %v110 = vpack.c.b16 %v101, %v100
    %v111 = vpack.c.b16 %v103, %v102
    %120 = vmatprep.subr.bf16.mxu0 0
    %121 = vmatpush1.bf16.msra.mxu0 %v104
    %122 = vmatprep.subr.bf16.mxu0 0
    %123 = vmatpush1.bf16.msra.mxu0 %v105
    %124 = vmatprep.subr.bf16.mxu0 0
    %125 = vmatpush1.bf16.msra.mxu0 %v106
    %126 = vmatprep.subr.bf16.mxu0 0
    %127 = vmatpush1.bf16.msra.mxu0 %v107
    %128 = vmatprep.subr.bf16.mxu0 0
    %129 = vmatpush1.bf16.msra.mxu0 %v108
    %130 = vmatprep.subr.bf16.mxu0 0
    %131 = vmatpush1.bf16.msra.mxu0 %v109
    %132 = vmatprep.subr.bf16.mxu0 0
    %133 = vmatpush1.bf16.msra.mxu0 %v110
    %134 = vmatprep.subr.bf16.mxu0 0
    %135 = vmatpush1.bf16.msra.mxu0 %v111
    %136 = vmatprep.subr.bf16.mxu0 0
    %137 = vmatpush1.bf16.msra.mxu0 0
    %138 = vmatprep.subr.bf16.mxu0 0
    %139 = vmatpush1.bf16.msra.mxu0 0
    %140 = vmatprep.subr.bf16.mxu0 0
    %141 = vmatpush1.bf16.msra.mxu0 0
    %142 = vmatprep.subr.bf16.mxu0 0
    %143 = vmatpush1.bf16.msra.mxu0 0
    %144 = vmatprep.subr.bf16.mxu0 0
    %145 = vmatpush1.bf16.msra.mxu0 0
    %146 = vmatprep.subr.bf16.mxu0 0
    %147 = vmatpush1.bf16.msra.mxu0 0
    %148 = vmatprep.subr.bf16.mxu0 0
    %149 = vmatpush1.bf16.msra.mxu0 0
    %150 = vmatprep.subr.bf16.mxu0 0
    %151 = vmatpush1.bf16.msra.mxu0 0
    %152 = vmatprep.mubr.bf16.mxu0 0
    %153 = vmatmul.mubr.bf16.gmra.mrb[0].mxu0 %v48
    %v154 = vpop.f32.mrb[0].mxu0
    %v155 = vadd.f32 %v70, %v154
    %v156 = vpop.f32.mrb[0].mxu0
    %v157 = vpop.f32.mrb[0].mxu0
    %v158 = vadd.f32 %v70, %v157
    %v159 = vpop.f32.mrb[0].mxu0
    %160 = vdwg.mxu0
    %161 = vst [vmem:[#allocation7] sm:$0xff] %v155
    %162 = vst [vmem:[#allocation7 + $0x8] sm:$0xff] %v158
    // Predicated region
    $region22: #{tpu_custom_call.1} parent=1 // pred_check
      _
    $region23: #{tpu_custom_call.1} parent=1 // pred_check_branch
      %164 = sbr.rel (0) target = $region25
    $region24: #{tpu_custom_call.1} parent=1 // pred_region
      %s166 = ssub.s32 256, 256
      %167 = vsyncadd [#allocation4], %s166
      %s168 = sshll.u32 [#allocation7], 4
      %s169 = int_to_ptr.vmem [resolvable:$true] %s168
      %174 = dma.vmem_to_hbm [thread:$0]  %s169, 256, %s3, [#allocation4], 128, 128, 8
    $region25: #{tpu_custom_call.1} parent=1 // pred_fallthru
      _
    // Predicated region
    $region26: #{tpu_custom_call.1} parent=1 // pred_check
      _
    $region27: #{tpu_custom_call.1} parent=1 // pred_check_branch
      %176 = sbr.rel (0) target = $region29
    $region28: #{tpu_custom_call.1} parent=1 // pred_region
      %177 = dma.done [#allocation4], 256
    $region29: #{tpu_custom_call.1} parent=1 // pred_fallthru
      _
    %178 = vsyncpa [#allocation3], 1
    %179 = vsyncpa [#allocation6], 1
    %180 = vsyncpa [#allocation4], 1

</llo_original>
